<compile_context>
chip_gen: v5e
topology: v5e:2x2
jax: 0.10.0
libtpu: 0.0.40
codegen_flags: <defaults>
</compile_context>

<pallas_src>
import math
import functools

import jax
import jax.numpy as jnp
from jax.experimental import pallas as pl
from jax.experimental.pallas import tpu as pltpu

DROPOUT_P = 0.1
_KEEP_THRESHOLD = int(DROPOUT_P * (1 << 32))        # drop iff u32 bits < threshold
_KEEP_SCALE = 1.0 / (1.0 - DROPOUT_P)               # inverted-dropout scale


# --------------------------------------------------------------------------- #
# Kernels
# --------------------------------------------------------------------------- #
def _pe_add_kernel(x_ref, pe_ref, o_ref):
    """Eval mode: out = x + pe (pe broadcast over the batch-block rows)."""
    y = x_ref[...].astype(jnp.float32) + pe_ref[...].astype(jnp.float32)
    o_ref[...] = y.astype(o_ref.dtype)


def _pe_add_dropout_kernel(x_ref, pe_ref, bits_ref, o_ref):
    """Train mode: out = dropout(x + pe) with a single multiply (no select)."""
    y = x_ref[...].astype(jnp.float32) + pe_ref[...].astype(jnp.float32)
    keep = (bits_ref[...] >= jnp.uint32(_KEEP_THRESHOLD)).astype(jnp.float32)
    o_ref[...] = (y * (keep * jnp.float32(_KEEP_SCALE))).astype(o_ref.dtype)


# --------------------------------------------------------------------------- #
# PE table (constant buffer, built once in plain JAX like the PyTorch __init__)
# --------------------------------------------------------------------------- #
def make_pe_table(max_len: int, d_model: int, dtype=jnp.float32):
    position = jnp.arange(max_len, dtype=jnp.float32)[:, None]        # (max_len, 1)
    exp_term = jnp.arange(0, d_model, 2, dtype=jnp.float32)           # (d_model/2,)
    div_term = jnp.exp(exp_term * (-math.log(10000.0) / d_model))
    angles = position * div_term                                      # (max_len, d_model/2)
    pe = jnp.zeros((1, max_len, d_model), dtype=jnp.float32)
    pe = pe.at[0, :, 0::2].set(jnp.sin(angles))
    pe = pe.at[0, :, 1::2].set(jnp.cos(angles))
    return pe.astype(dtype)


# --------------------------------------------------------------------------- #
# Block-size selection: ~2 MiB blocks, second-minor dim = B or multiple of 8,
# last dim = N or multiple of 128. Fits well under the default scoped-VMEM
# limits on v5e (16 MiB) / v6e / v7x (32 MiB) with double-buffered streams.
# --------------------------------------------------------------------------- #
def _pick_blocks(B: int, N: int, itemsize: int = 4, target_bytes: int = 2 << 20):
    tb_min = B if B <= 8 else 8
    max_tn = max(128, (target_bytes // (tb_min * itemsize * 128)) * 128)
    TN = N if N <= max_tn else max_tn
    rows_fit = max(tb_min, target_bytes // (TN * itemsize))
    if rows_fit >= B:
        TB = B
    else:
        TB = min(B, max(8, (rows_fit // 8) * 8))
    return TB, TN


# --------------------------------------------------------------------------- #
# Wrapper
# --------------------------------------------------------------------------- #
def position_encoding(x, pe, *, key=None, training: bool = True):
    """x: (B, S, D). pe: (1, max_len, D). Returns dropout(x + pe[:, :S, :])."""
    B, S, D = x.shape
    N = S * D

    # Lane-dense presentation: purely elementwise op, so flattening (S, D) -> N
    # does not change semantics but makes stores unmasked full-lane vst's.
    x2 = x.reshape(B, N)
    pe2 = pe[:, :S, :].astype(jnp.float32).reshape(1, N)

    TB, TN = _pick_blocks(B, N)
    grid = (pl.cdiv(B, TB), pl.cdiv(N, TN))

    x_spec = pl.BlockSpec((TB, TN), lambda b, n: (b, n))
    pe_spec = pl.BlockSpec((1, TN), lambda b, n: (0, n))   # constant over batch axis
    out_spec = pl.BlockSpec((TB, TN), lambda b, n: (b, n))

    if training:
        if key is None:
            key = jax.random.PRNGKey(0)
        bits = jax.random.bits(key, (B, N), dtype=jnp.uint32)
        kernel = _pe_add_dropout_kernel
        in_specs = [x_spec, pe_spec, pl.BlockSpec((TB, TN), lambda b, n: (b, n))]
        args = (x2, pe2, bits)
    else:
        kernel = _pe_add_kernel
        in_specs = [x_spec, pe_spec]
        args = (x2, pe2)

    out = pl.pallas_call(
        kernel,
        out_shape=jax.ShapeDtypeStruct((B, N), x.dtype),
        grid_spec=pltpu.PrefetchScalarGridSpec(
            num_scalar_prefetch=0,
            grid=grid,
            in_specs=in_specs,
            out_specs=out_spec,
        ),
        compiler_params=pltpu.CompilerParams(
            dimension_semantics=("parallel", "parallel"),
        ),
    )(*args)
    return out.reshape(B, S, D)


# --------------------------------------------------------------------------- #
# Self-test
# --------------------------------------------------------------------------- #
if __name__ == "__main__":
    # Small shapes consistent with the module: B=2, S=8, d_model=32, max_len=16.
    B, S, D, MAX_LEN = 2, 8, 32, 16

    root = jax.random.PRNGKey(0)
    x_key, drop_key = jax.random.split(root)
    x = jax.random.normal(x_key, (B, S, D), dtype=jnp.float32)
    pe = make_pe_table(MAX_LEN, D, dtype=jnp.float32)

    # Eval-mode forward (dropout = identity) -> exact check vs pure-JAX reference.
    out_eval = jax.block_until_ready(position_encoding(x, pe, training=False))
    ref_eval = x + pe[:, :S, :]
    assert jnp.allclose(out_eval, ref_eval, atol=1e-6), "eval-mode mismatch"

    # Training-mode forward (with dropout). The dropout bits are a deterministic
    # function of drop_key, so we can rebuild the exact reference.
    out_train = jax.block_until_ready(
        position_encoding(x, pe, key=drop_key, training=True))
    bits = jax.random.bits(drop_key, (B, S * D), dtype=jnp.uint32).reshape(B, S, D)
    keep = bits >= jnp.uint32(_KEEP_THRESHOLD)
    ref_train = jnp.where(keep, ref_eval * jnp.float32(_KEEP_SCALE), 0.0)
    assert jnp.allclose(out_train, ref_train, atol=1e-5), "train-mode mismatch"

    # Sanity: training output is either 0 or (x+pe)/(1-p) elementwise.
    ok = jnp.logical_or(jnp.isclose(out_train, 0.0),
                        jnp.isclose(out_train, ref_eval * jnp.float32(_KEEP_SCALE),
                                    atol=1e-5))
    assert bool(jnp.all(ok)), "dropout-mode values inconsistent"

    print("KERNEL_OK")
</pallas_src>

<mosaic_0001>
module attributes {stable_mosaic.version = 11 : i64} {
  func.func @_pe_add_kernel(%arg0: i32, %arg1: i32, %arg2: memref<2x256xf32, #tpu.memory_space<vmem>>, %arg3: memref<1x256xf32, #tpu.memory_space<vmem>>, %arg4: memref<2x256xf32, #tpu.memory_space<vmem>>) attributes {dimension_semantics = [#tpu.dimension_semantics<parallel>, #tpu.dimension_semantics<parallel>], iteration_bounds = array<i64: 1, 1>, scalar_prefetch = 0 : i64, scratch_operands = 0 : i64, tpu.core_type = #tpu.core_type<tc>, window_params = [{transform_indices = @transform_0, window_bounds = array<i64: 2, 256>}, {transform_indices = @transform_1, window_bounds = array<i64: 1, 256>}, {transform_indices = @transform_2, window_bounds = array<i64: 2, 256>}]} {
    %c0 = arith.constant 0 : index
    %c0_0 = arith.constant 0 : index
    %0 = vector.load %arg2[%c0, %c0_0] : memref<2x256xf32, #tpu.memory_space<vmem>>, vector<2x256xf32>
    %c0_1 = arith.constant 0 : index
    %c0_2 = arith.constant 0 : index
    %1 = vector.load %arg3[%c0_1, %c0_2] : memref<1x256xf32, #tpu.memory_space<vmem>>, vector<1x256xf32>
    %2 = vector.broadcast %1 : vector<1x256xf32> to vector<2x256xf32>
    %3 = arith.addf %0, %2 : vector<2x256xf32>
    %c0_3 = arith.constant 0 : index
    %c0_4 = arith.constant 0 : index
    %4 = vector.load %arg4[%c0_3, %c0_4] : memref<2x256xf32, #tpu.memory_space<vmem>>, vector<2x256xf32>
    tpu.vector_store %arg4[%c0_3, %c0_4], %3 {strides = array<i32>} : memref<2x256xf32, #tpu.memory_space<vmem>>, vector<2x256xf32>,
    return
  }
  func.func @transform_0(%arg0: i32, %arg1: i32) -> (i32, i32) {
    %c0_i32 = arith.constant 0 : i32
    return %arg0, %arg1 : i32, i32
  }
  func.func @transform_1(%arg0: i32, %arg1: i32) -> (i32, i32) {
    %c0_i32 = arith.constant 0 : i32
    %c0_i32_0 = arith.constant 0 : i32
    return %c0_i32, %arg1 : i32, i32
  }
  func.func @transform_2(%arg0: i32, %arg1: i32) -> (i32, i32) {
    %c0_i32 = arith.constant 0 : i32
    return %arg0, %arg1 : i32, i32
  }
}

</mosaic_0001>

<llo_original>
// kernel: tpu_custom_call.1
$region0: #{tpu_custom_call.1}
  #allocation0 [shape = 'u32[]', space=smem, size = 0x4, offset = 0x4, fixed_abs, tag = 'smem constant byte address 0x4 - core index']
  #allocation1 [shape = 'u32[72,128]{1,0:T(1,128)}', space=vmem, size = 0x9000, scoped, tag = 'internal scratch']
  %s0 = inlined_call_operand.hbm [shape: f32[2,256], index: 0, kind: input, shape index: {}]
  %s1 = inlined_call_operand.hbm [shape: f32[1,256], index: 1, kind: input, shape index: {}]
  %s2 = inlined_call_operand.hbm [shape: f32[2,256], index: 2, kind: output, shape index: {}]
  %s3 = sld [smem:[#allocation0]]
  $region26: #{tpu_custom_call.1} parent=0
    _
  %s5 = ssub.s32 1, %s3
  %s6 = scalar_select 0, %s5, %s3
  $region1: #{tpu_custom_call.1} parent=0
    #allocation2 [shape = 'u8[2048]{0}', space=vmem, size = 0x800, scoped, tag = 'input window, operand 0, single buffered']
    #allocation3 [shape = 's32[1]{0}', space=sflag, size = 0x4, scoped, tag = 'scoped memory for tpu_custom_call.1']
    #allocation4 [shape = 's32[1]{0}', space=sflag, size = 0x4, scoped, tag = 'scoped memory for tpu_custom_call.1']
    #allocation5 [shape = 'u8[1024]{0}', space=vmem, size = 0x400, scoped, tag = 'input window, operand 1, single buffered']
    #allocation6 [shape = 's32[1]{0}', space=sflag, size = 0x4, scoped, tag = 'scoped memory for tpu_custom_call.1']
    #allocation7 [shape = 'u8[2048]{0}', space=vmem, size = 0x800, scoped, tag = 'output window, operand 0, single buffered']
    %7 = vsyncpa [#allocation3], 0
    %8 = vsyncpa [#allocation6], 0
    %9 = vsyncpa [#allocation4], 0
    // Predicated region
    $region2: #{tpu_custom_call.1} parent=1 // pred_check
      _
    $region3: #{tpu_custom_call.1} parent=1 // pred_check_branch
      %11 = sbr.rel (0) target = $region5
    $region4: #{tpu_custom_call.1} parent=1 // pred_region
      %13 = vsyncadd [#allocation3], 0
      %s15 = sshll.u32 %s0, 4
      %s16 = int_to_ptr.hbm [resolvable:$true] %s15
      %s17 = sshll.u32 [#allocation2], 4
      %s18 = int_to_ptr.vmem [resolvable:$true] %s17
      %20 = dma.hbm_to_vmem [thread:$0]  %s16, 64, %s18, [#allocation3]
    $region5: #{tpu_custom_call.1} parent=1 // pred_fallthru
      _
    // Predicated region
    $region6: #{tpu_custom_call.1} parent=1 // pred_check
      _
    $region7: #{tpu_custom_call.1} parent=1 // pred_check_branch
      %22 = sbr.rel (0) target = $region9
    $region8: #{tpu_custom_call.1} parent=1 // pred_region
      %24 = vsyncadd [#allocation6], 0
      %s26 = sshll.u32 %s1, 4
      %s27 = int_to_ptr.hbm [resolvable:$true] %s26
      %s28 = sshll.u32 [#allocation5], 4
      %s29 = int_to_ptr.vmem [resolvable:$true] %s28
      %31 = dma.hbm_to_vmem [thread:$0]  %s27, 32, %s29, [#allocation6]
    $region9: #{tpu_custom_call.1} parent=1 // pred_fallthru
      _
    // Predicated region
    $region10: #{tpu_custom_call.1} parent=1 // pred_check
      _
    $region11: #{tpu_custom_call.1} parent=1 // pred_check_branch
      %33 = sbr.rel (0) target = $region13
    $region12: #{tpu_custom_call.1} parent=1 // pred_region
      %35 = dma.done [#allocation3], 64
    $region13: #{tpu_custom_call.1} parent=1 // pred_fallthru
      _
    // Predicated region
    $region14: #{tpu_custom_call.1} parent=1 // pred_check
      _
    $region15: #{tpu_custom_call.1} parent=1 // pred_check_branch
      %37 = sbr.rel (0) target = $region17
    $region16: #{tpu_custom_call.1} parent=1 // pred_region
      %39 = dma.done [#allocation6], 32
    $region17: #{tpu_custom_call.1} parent=1 // pred_fallthru
      _
    %v40 = vld [vmem:[#allocation2] sm:$0xf]
    %v41 = vld [vmem:[#allocation5] sm:$0x3]
    %v43 = vperm.slane %v41, 0
    %v44 = vperm.slane %v41, 1
    %v45 = vrot.slane %v44, 6
    %vm46 = vcmask 1041408
    %v47 = vsel %vm46, %v43, %v45
    %v49 = vadd.f32 %v40, %v47
    %50 = vst [vmem:[#allocation7] sm:$0xf] %v49
    // Predicated region
    $region18: #{tpu_custom_call.1} parent=1 // pred_check
      _
    $region19: #{tpu_custom_call.1} parent=1 // pred_check_branch
      %52 = sbr.rel (0) target = $region21
    $region20: #{tpu_custom_call.1} parent=1 // pred_region
      %54 = vsyncadd [#allocation4], 0
      %s56 = sshll.u32 [#allocation7], 4
      %s57 = int_to_ptr.vmem [resolvable:$true] %s56
      %s58 = sshll.u32 %s2, 4
      %s59 = int_to_ptr.hbm [resolvable:$true] %s58
      %61 = dma.vmem_to_hbm [thread:$0]  %s57, 64, %s59, [#allocation4]
    $region21: #{tpu_custom_call.1} parent=1 // pred_fallthru
      _
    // Predicated region
    $region22: #{tpu_custom_call.1} parent=1 // pred_check
      _
    $region23: #{tpu_custom_call.1} parent=1 // pred_check_branch
      %63 = sbr.rel (0) target = $region25
    $region24: #{tpu_custom_call.1} parent=1 // pred_region
      %65 = dma.done [#allocation4], 64
    $region25: #{tpu_custom_call.1} parent=1 // pred_fallthru
      _
    %66 = vsyncpa [#allocation3], 1
    %67 = vsyncpa [#allocation6], 1
    %68 = vsyncpa [#allocation4], 1

</llo_original>
